<compile_context>
chip_gen: v7x
topology: tpu7x:2x2x1
jax: 0.10.0
libtpu: 0.0.40
codegen_flags: <defaults>
</compile_context>

<pallas_src>
import math

import jax
import jax.numpy as jnp
from jax.experimental import pallas as pl
from jax.experimental.pallas import tpu as pltpu


def _prelu_kernel(x_ref, w_ref, o_ref):
    # x_ref: (TR, LANE_W) tile, w_ref: (1, LANE_W) slope row, o_ref: (TR, LANE_W)
    x = x_ref[...]
    w = w_ref[...]  # broadcasts over the sublane (row) axis on the VPU
    o_ref[...] = jnp.where(x > 0, x, w * x)


def _chip_defaults():
    """Pick (target_tile_bytes, vmem_limit_bytes) from the chip's VMEM size."""
    try:
        vmem_cap = int(pltpu.get_tpu_info().vmem_capacity_bytes)
    except Exception:
        vmem_cap = 64 * 1024 * 1024  # conservative (v7x-sized) fallback
    # v7x (64 MiB VMEM) -> 4 MiB tiles; v5e/v6e (128 MiB) -> 8 MiB tiles.
    target_tile = max(2 * 1024 * 1024, min(8 * 1024 * 1024, vmem_cap // 16))
    # 2 in + 2 out double buffers + weight + compiler scratch must fit.
    vmem_limit = min(64 * 1024 * 1024, (vmem_cap * 3) // 4)
    return target_tile, vmem_limit


def _choose_layout(x, weight):
    """Pick a lane-dense 2-D view of x and a matching (1, lane_w) slope row."""
    B, S, H = x.shape
    dtype = x.dtype
    total = B * S * H

    if H % 128 == 0:
        lane_w = H
    elif 128 % H == 0 and total % 128 == 0:
        # Pack 128 // H logical rows into one 128-lane physical row.
        lane_w = 128
    else:
        lcm = (H * 128) // math.gcd(H, 128)
        if lcm <= 512 and total % lcm == 0:
            # e.g. H = 96 -> 384-lane rows: unmasked full-width stores.
            lane_w = lcm
        else:
            # Fallback: full-extent narrow last dim (masked stores).
            lane_w = H

    x2d = x.reshape(total // lane_w, lane_w)  # row-major flatten: free reshape
    reps = lane_w // H
    w_row = weight.astype(dtype)
    if reps > 1:
        w_row = jnp.tile(w_row, reps)
    w_row = w_row.reshape(1, lane_w)
    return x2d, w_row, lane_w


def custom_prelu(x, weight, *, target_tile_bytes=None, vmem_limit_bytes=None,
                 donate_x=False):
    """PReLU with per-channel slope on the last axis.  x: (B,S,H), weight: (H,)."""
    B, S, H = x.shape
    dtype = x.dtype
    dtype_bytes = jnp.dtype(dtype).itemsize

    default_tile, default_limit = _chip_defaults()
    if target_tile_bytes is None:
        target_tile_bytes = default_tile
    if vmem_limit_bytes is None:
        vmem_limit_bytes = default_limit

    x2d, w_row, lane_w = _choose_layout(x, weight)
    total_rows = x2d.shape[0]

    # Dtype-aware sublane rounding: 8 (f32) / 16 (bf16) / 32 (int8/fp8).
    sublane_mult = max(8, 32 // dtype_bytes)

    tr = target_tile_bytes // (lane_w * dtype_bytes)
    tr = max(sublane_mult, (tr // sublane_mult) * sublane_mult)
    if tr >= total_rows:
        tr = total_rows  # single full-extent block (always legal)

    # Ragged grid: no pre-pad / post-slice; Pallas masks the trailing block.
    grid = (pl.cdiv(total_rows, tr),)

    out2d = pl.pallas_call(
        _prelu_kernel,
        out_shape=jax.ShapeDtypeStruct((total_rows, lane_w), dtype),
        grid_spec=pltpu.PrefetchScalarGridSpec(
            num_scalar_prefetch=0,
            grid=grid,
            in_specs=[
                pl.BlockSpec((tr, lane_w), lambda i: (i, 0)),
                pl.BlockSpec((1, lane_w), lambda i: (0, 0)),  # weight resident
            ],
            out_specs=pl.BlockSpec((tr, lane_w), lambda i: (i, 0)),
        ),
        compiler_params=pltpu.CompilerParams(
            dimension_semantics=("parallel",),
            vmem_limit_bytes=vmem_limit_bytes,
        ),
        input_output_aliases=({0: 0} if donate_x else {}),
    )(x2d, w_row)

    return out2d.reshape(B, S, H)


def _reference(x, weight):
    return jnp.where(x > 0, x, weight[None, None, :] * x)


if __name__ == "__main__":
    key = jax.random.PRNGKey(0)

    # ---- primary check: shapes consistent with the module (lane-dense repack,
    #      H=32 -> 128-lane rows since 2*8*32 is a multiple of 128)
    B, S, H = 2, 8, 32
    x = jax.random.normal(key, (B, S, H), dtype=jnp.float32)
    weight = jnp.full((H,), 0.25, dtype=jnp.float32)  # torch.ones(hidden)*0.25
    out = custom_prelu(x, weight)
    jax.block_until_ready(out)
    assert out.shape == (B, S, H)
    assert jnp.allclose(out, _reference(x, weight), atol=1e-6), "mismatch (small)"

    # ---- multi-tile ragged grid (no pad/slice): H % 128 == 0, 3000 rows,
    #      small tile forces several blocks plus a partial trailing block.
    k1, k2, k3 = jax.random.split(key, 3)
    B2, S2, H2 = 3, 1000, 256
    x2 = jax.random.normal(k1, (B2, S2, H2), dtype=jnp.float32)
    w2 = jnp.full((H2,), 0.25, dtype=jnp.float32)
    out2 = custom_prelu(x2, w2, target_tile_bytes=256 * 1024)
    jax.block_until_ready(out2)
    assert jnp.allclose(out2, _reference(x2, w2), atol=1e-6), "mismatch (ragged)"

    # ---- lcm repack path: H = 96 -> 384-lane rows.
    B3, S3, H3 = 2, 8, 96
    x3 = jax.random.normal(k2, (B3, S3, H3), dtype=jnp.float32)
    w3 = jnp.full((H3,), 0.25, dtype=jnp.float32)
    out3 = custom_prelu(x3, w3)
    jax.block_until_ready(out3)
    assert jnp.allclose(out3, _reference(x3, w3), atol=1e-6), "mismatch (lcm)"

    # ---- narrow fallback path: H = 40, row count with no exact repack.
    B4, S4, H4 = 2, 7, 40
    x4 = jax.random.normal(k3, (B4, S4, H4), dtype=jnp.float32)
    w4 = jnp.full((H4,), 0.25, dtype=jnp.float32)
    out4 = custom_prelu(x4, w4)
    jax.block_until_ready(out4)
    assert jnp.allclose(out4, _reference(x4, w4), atol=1e-6), "mismatch (narrow)"

    print("KERNEL_OK")
</pallas_src>

<mosaic_0001>
module attributes {stable_mosaic.version = 11 : i64} {
  func.func @_prelu_kernel(%arg0: i32, %arg1: memref<4x128xf32, #tpu.memory_space<vmem>>, %arg2: memref<1x128xf32, #tpu.memory_space<vmem>>, %arg3: memref<4x128xf32, #tpu.memory_space<vmem>>) attributes {dimension_semantics = [#tpu.dimension_semantics<parallel>], iteration_bounds = array<i64: 1>, scalar_prefetch = 0 : i64, scratch_operands = 0 : i64, tpu.core_type = #tpu.core_type<tc>, window_params = [{transform_indices = @transform_0, window_bounds = array<i64: 4, 128>}, {pipeline_mode = #tpu.pipeline_mode<synchronous>, transform_indices = @transform_1, window_bounds = array<i64: 1, 128>}, {transform_indices = @transform_2, window_bounds = array<i64: 4, 128>}]} {
    %c0 = arith.constant 0 : index
    %c0_0 = arith.constant 0 : index
    %0 = vector.load %arg1[%c0, %c0_0] : memref<4x128xf32, #tpu.memory_space<vmem>>, vector<4x128xf32>
    %c0_1 = arith.constant 0 : index
    %c0_2 = arith.constant 0 : index
    %1 = vector.load %arg2[%c0_1, %c0_2] : memref<1x128xf32, #tpu.memory_space<vmem>>, vector<1x128xf32>
    %cst = arith.constant 0.000000e+00 : f32
    %2 = vector.broadcast %cst : f32 to vector<4x128xf32>
    %3 = arith.cmpf ogt, %0, %2 : vector<4x128xf32>
    %4 = vector.broadcast %1 : vector<1x128xf32> to vector<4x128xf32>
    %5 = arith.mulf %4, %0 : vector<4x128xf32>
    %6 = arith.select %3, %0, %5 : vector<4x128xi1>, vector<4x128xf32>
    %c0_3 = arith.constant 0 : index
    %c0_4 = arith.constant 0 : index
    %7 = vector.load %arg3[%c0_3, %c0_4] : memref<4x128xf32, #tpu.memory_space<vmem>>, vector<4x128xf32>
    tpu.vector_store %arg3[%c0_3, %c0_4], %6 {strides = array<i32>} : memref<4x128xf32, #tpu.memory_space<vmem>>, vector<4x128xf32>,
    return
  }
  func.func @transform_0(%arg0: i32) -> (i32, i32) {
    %c0_i32 = arith.constant 0 : i32
    %c0_i32_0 = arith.constant 0 : i32
    return %arg0, %c0_i32 : i32, i32
  }
  func.func @transform_1(%arg0: i32) -> (i32, i32) {
    %c0_i32 = arith.constant 0 : i32
    %c0_i32_0 = arith.constant 0 : i32
    %c0_i32_1 = arith.constant 0 : i32
    return %c0_i32, %c0_i32_0 : i32, i32
  }
  func.func @transform_2(%arg0: i32) -> (i32, i32) {
    %c0_i32 = arith.constant 0 : i32
    %c0_i32_0 = arith.constant 0 : i32
    return %arg0, %c0_i32 : i32, i32
  }
}

</mosaic_0001>

<llo_original>
// kernel: tpu_custom_call.1
$region0: #{tpu_custom_call.1}
  #allocation0 [shape = 'u32[]', space=smem, size = 0x4, offset = 0x4, fixed_abs, tag = 'smem constant byte address 0x4 - core index']
  #allocation1 [shape = 'u32[144,128]{1,0:T(1,128)}', space=vmem, size = 0x12000, scoped, tag = 'internal scratch']
  %s0 = inlined_call_operand.hbm [shape: f32[4,128], index: 0, kind: input, shape index: {}]
  %s1 = inlined_call_operand.vmem [shape: f32[1,128], index: 1, kind: input, shape index: {}]
  %s2 = inlined_call_operand.hbm [shape: f32[4,128], index: 2, kind: output, shape index: {}]
  %s3 = sld [smem:[#allocation0]]
  $region22: #{tpu_custom_call.1} parent=0
    _
  %s5 = ssub.s32 1, %s3
  %s6 = scalar_select 0, %s5, %s3
  $region1: #{tpu_custom_call.1} parent=0
    #allocation2 [shape = 'u8[2048]{0}', space=vmem, size = 0x800, scoped, tag = 'input window, operand 0, single buffered']
    #allocation3 [shape = 's32[1]{0}', space=sflag, size = 0x4, scoped, tag = 'scoped memory for tpu_custom_call.1']
    #allocation4 [shape = 's32[1]{0}', space=sflag, size = 0x4, scoped, tag = 'scoped memory for tpu_custom_call.1']
    #allocation5 [shape = 'u8[2048]{0}', space=vmem, size = 0x800, scoped, tag = 'output window, operand 0, single buffered']
    %7 = vsyncpa [#allocation3], 0
    %8 = vsyncpa [#allocation4], 0
    // Predicated region
    $region2: #{tpu_custom_call.1} parent=1 // pred_check
      _
    $region3: #{tpu_custom_call.1} parent=1 // pred_check_branch
      %10 = sbr.rel (0) target = $region5
    $region4: #{tpu_custom_call.1} parent=1 // pred_region
      %s12 = ssub.s32 64, 64
      %13 = vsyncadd [#allocation3], %s12
      %s15 = sshll.u32 [#allocation2], 4
      %s16 = int_to_ptr.vmem [resolvable:$true] %s15
      %18 = dma.hbm_to_vmem [thread:$0]  %s0, 64, %s16, [#allocation3]
    $region5: #{tpu_custom_call.1} parent=1 // pred_fallthru
      _
    // Predicated region
    $region6: #{tpu_custom_call.1} parent=1 // pred_check
      _
    $region7: #{tpu_custom_call.1} parent=1 // pred_check_branch
      %20 = sbr.rel (0) target = $region9
    $region8: #{tpu_custom_call.1} parent=1 // pred_region
      _
    $region9: #{tpu_custom_call.1} parent=1 // pred_fallthru
      _
    // Predicated region
    $region10: #{tpu_custom_call.1} parent=1 // pred_check
      _
    $region11: #{tpu_custom_call.1} parent=1 // pred_check_branch
      %22 = sbr.rel (0) target = $region13
    $region12: #{tpu_custom_call.1} parent=1 // pred_region
      %23 = dma.done [#allocation3], 64
    $region13: #{tpu_custom_call.1} parent=1 // pred_fallthru
      _
    %v24 = vld [vmem:[#allocation2] sm:$0xf]
    %v25 = vld [vmem:[%s1] sm:$0x1]
    %vm26 = vcmp.gt.f32.partialorder %v24, 0.0
    %v28 = vlaneseq
    %v29 = vshrl.u32 %v28, 7
    %v30 = vsub.s32 0, %v29
    %v31 = vrot.slane %v25, %v30
    %v33 = vmul.f32 %v31, %v24
    %v34 = vsel %vm26, %v24, %v33
    %35 = vst [vmem:[#allocation5] sm:$0xf] %v34
    // Predicated region
    $region14: #{tpu_custom_call.1} parent=1 // pred_check
      _
    $region15: #{tpu_custom_call.1} parent=1 // pred_check_branch
      %37 = sbr.rel (0) target = $region17
    $region16: #{tpu_custom_call.1} parent=1 // pred_region
      %s39 = ssub.s32 64, 64
      %40 = vsyncadd [#allocation4], %s39
      %s42 = sshll.u32 [#allocation5], 4
      %s43 = int_to_ptr.vmem [resolvable:$true] %s42
      %45 = dma.vmem_to_hbm [thread:$0]  %s43, 64, %s2, [#allocation4]
    $region17: #{tpu_custom_call.1} parent=1 // pred_fallthru
      _
    // Predicated region
    $region18: #{tpu_custom_call.1} parent=1 // pred_check
      _
    $region19: #{tpu_custom_call.1} parent=1 // pred_check_branch
      %47 = sbr.rel (0) target = $region21
    $region20: #{tpu_custom_call.1} parent=1 // pred_region
      %48 = dma.done [#allocation4], 64
    $region21: #{tpu_custom_call.1} parent=1 // pred_fallthru
      _
    %49 = vsyncpa [#allocation3], 1
    %50 = vsyncpa [#allocation4], 1

</llo_original>
